<compile_context>
chip_gen: v6e
topology: v6e:2x2x1
jax: 0.10.0
libtpu: 0.0.40
codegen_flags: <defaults>
</compile_context>

<pallas_src>
import jax
import jax.numpy as jnp
from jax.experimental import pallas as pl
from jax.experimental.pallas import tpu as pltpu

_LANE = 128
_ALIGN = 8 * _LANE  # 1024: smallest chunk handled by the 2D kernel path


def _sin_cos_kernel(x_ref, o_ref):
    # Upcast in-kernel: v5e's VPU has no bf16 math, and reading the input in
    # its native dtype keeps HBM traffic narrow for sub-f32 workloads.
    x = x_ref[...].astype(jnp.float32)
    o_ref[...] = jnp.sin(jnp.cos(x)).astype(o_ref.dtype)


def _sin_cos_ref(x):
    # Same numerics as the kernel (f32 compute, cast back) so results do not
    # depend on which side of the size threshold an input lands.
    return jnp.sin(jnp.cos(x.astype(jnp.float32))).astype(x.dtype)


def _round_up(v, m):
    return -(-v // m) * m


def _sublane(dtype):
    # Native sublane packing: 8 rows for 4-byte, 16 for 2-byte, 32 for 1-byte.
    return max(8, 32 // jnp.dtype(dtype).itemsize)


def _choose_cols(n, sublane):
    """Largest lane-dense (multiple of 128) last dim dividing n, preferring a
    width that still leaves enough rows for >= 8 grid steps."""
    cands = [c for c in (2048, 1024, 512, 256, 128) if n % c == 0]
    if not cands:
        return None
    good = [c for c in cands if n // c >= 8 * sublane]
    return good[0] if good else cands[-1]


def _choose_tile_rows(rows, cols, itemsize, sublane):
    """Pick the row tile so that:
      * the block stays <= ~2 MiB (fits every generation's VMEM budget with
        in+out double buffering),
      * the grid has >= 8 steps when rows allow (>= 4 per v7x TensorCore),
      * the step count is even (no whole-block imbalance across the 2 TCs),
      * the tile is a multiple of the dtype's native sublane packing.
    Among candidates meeting those goals, take the largest tile."""
    target_block_bytes = 2 * 1024 * 1024
    rows_padded = _round_up(rows, sublane)
    max_tr = (target_block_bytes // (cols * itemsize)) // sublane * sublane
    max_tr = max(sublane, min(max_tr, rows_padded))

    max_steps = pl.cdiv(rows, sublane)
    goal_steps = min(8, max_steps)
    want_even = max_steps >= 2

    best_tr, best_key = sublane, None
    for tr in range(sublane, max_tr + 1, sublane):
        steps = pl.cdiv(rows, tr)
        key = (steps >= goal_steps, (steps % 2 == 0) or not want_even, tr)
        if best_key is None or key > best_key:
            best_tr, best_key = tr, key
    return best_tr


def _run_pallas_2d(x2d, out_dtype, donate):
    rows, cols = x2d.shape
    itemsize = jnp.dtype(out_dtype).itemsize
    sublane = _sublane(out_dtype)
    tr = _choose_tile_rows(rows, cols, itemsize, sublane)
    grid = (pl.cdiv(rows, tr),)

    n_elems = rows * cols
    # sin/cos lower to VPU range reduction + polynomial (not single EUP ops):
    # report ~20 flops/elem each so XLA sees this as compute, not MXU work.
    cost = pl.CostEstimate(
        flops=40 * n_elems,
        transcendentals=0,
        bytes_accessed=2 * n_elems * itemsize,  # read + write
    )

    return pl.pallas_call(
        _sin_cos_kernel,
        out_shape=jax.ShapeDtypeStruct((rows, cols), out_dtype),
        grid=grid,
        in_specs=[pl.BlockSpec((tr, cols), lambda i: (i, 0))],
        out_specs=pl.BlockSpec((tr, cols), lambda i: (i, 0)),
        compiler_params=pltpu.CompilerParams(
            dimension_semantics=("parallel",),
        ),
        cost_estimate=cost,
        input_output_aliases={0: 0} if donate else {},
    )(x2d)


def sin_of_cos(x: jax.Array, *, force_pallas: bool = False,
               donate: bool = False) -> jax.Array:
    """Compute sin(cos(x)) elementwise with a Pallas TPU kernel.

    donate=True aliases the kernel output onto its input buffer; only use it
    when x is dead after the call (otherwise XLA inserts a defensive copy).
    """
    orig_shape = x.shape
    n = x.size
    itemsize = jnp.dtype(x.dtype).itemsize

    # Tiny inputs: launch + wrapper overhead dwarfs the work; XLA fuses
    # sin(cos(x)) into one pass anyway.
    if n == 0 or (not force_pallas and n * itemsize < 256 * 1024):
        return _sin_cos_ref(x)

    sublane = _sublane(x.dtype)

    cols = _choose_cols(n, sublane)
    if cols is not None:
        # Aligned case: pure reshape of a contiguous array (no HBM copy).
        x2d = jnp.reshape(x, (n // cols, cols))
        out2d = _run_pallas_2d(x2d, x.dtype, donate)
        return jnp.reshape(out2d, orig_shape)

    # Unaligned total size (rare): run the kernel on the aligned prefix and
    # compute the < 1024-element tail with plain jnp — no full-array pad or
    # slice passes over HBM.
    x_flat = jnp.ravel(x)
    n_bulk = n - n % _ALIGN
    if n_bulk == 0:
        return jnp.reshape(_sin_cos_ref(x_flat), orig_shape)
    cols = _choose_cols(n_bulk, sublane)
    bulk2d = _run_pallas_2d(
        jnp.reshape(x_flat[:n_bulk], (n_bulk // cols, cols)), x.dtype, donate)
    tail = _sin_cos_ref(x_flat[n_bulk:])
    out_flat = jnp.concatenate([jnp.reshape(bulk2d, (-1,)), tail])
    return jnp.reshape(out_flat, orig_shape)


if __name__ == "__main__":
    k0, k1, k2 = jax.random.split(jax.random.PRNGKey(0), 3)

    # 1) Small NCHW input consistent with the module's single-tensor forward;
    #    force the Pallas path so the kernel itself is exercised/validated.
    x_small = jax.random.normal(k0, (2, 4, 16, 16), dtype=jnp.float32)
    y_small = jax.block_until_ready(sin_of_cos(x_small, force_pallas=True))
    assert y_small.shape == x_small.shape and y_small.dtype == x_small.dtype
    assert jnp.allclose(y_small, jnp.sin(jnp.cos(x_small)), atol=1e-5, rtol=1e-5)

    # 2) Larger aligned input exercising the streaming path (cols=2048,
    #    >= 8 even grid steps for the v7x 2-TC split + pipelining).
    x_big = jax.random.normal(k1, (8, 16, 32, 128), dtype=jnp.float32)
    y_big = jax.block_until_ready(sin_of_cos(x_big))
    assert jnp.allclose(y_big, jnp.sin(jnp.cos(x_big)), atol=1e-5, rtol=1e-5)

    # 3) Unaligned-shape input exercising the aligned-prefix + jnp-tail path.
    x_odd = jax.random.normal(k2, (3, 5, 7, 11), dtype=jnp.float32)
    y_odd = jax.block_until_ready(sin_of_cos(x_odd, force_pallas=True))
    assert y_odd.shape == x_odd.shape
    assert jnp.allclose(y_odd, jnp.sin(jnp.cos(x_odd)), atol=1e-5, rtol=1e-5)

    print("KERNEL_OK")
</pallas_src>

<mosaic_0001>
module attributes {stable_mosaic.version = 11 : i64} {
  func.func @_sin_cos_kernel(%arg0: i32, %arg1: memref<8x128xf32, #tpu.memory_space<vmem>>, %arg2: memref<8x128xf32, #tpu.memory_space<vmem>>) attributes {dimension_semantics = [#tpu.dimension_semantics<parallel>], iteration_bounds = array<i64: 2>, scalar_prefetch = 0 : i64, scratch_operands = 0 : i64, tpu.core_type = #tpu.core_type<tc>, window_params = [{transform_indices = @transform_0, window_bounds = array<i64: 8, 128>}, {transform_indices = @transform_1, window_bounds = array<i64: 8, 128>}]} {
    %c0 = arith.constant 0 : index
    %c0_0 = arith.constant 0 : index
    %0 = vector.load %arg1[%c0, %c0_0] : memref<8x128xf32, #tpu.memory_space<vmem>>, vector<8x128xf32>
    %1 = math.cos %0 : vector<8x128xf32>
    %2 = math.sin %1 : vector<8x128xf32>
    %c0_1 = arith.constant 0 : index
    %c0_2 = arith.constant 0 : index
    %3 = vector.load %arg2[%c0_1, %c0_2] : memref<8x128xf32, #tpu.memory_space<vmem>>, vector<8x128xf32>
    tpu.vector_store %arg2[%c0_1, %c0_2], %2 {strides = array<i32>} : memref<8x128xf32, #tpu.memory_space<vmem>>, vector<8x128xf32>,
    return
  }
  func.func @transform_0(%arg0: i32) -> (i32, i32) {
    %c0_i32 = arith.constant 0 : i32
    %c0_i32_0 = arith.constant 0 : i32
    return %arg0, %c0_i32 : i32, i32
  }
  func.func @transform_1(%arg0: i32) -> (i32, i32) {
    %c0_i32 = arith.constant 0 : i32
    %c0_i32_0 = arith.constant 0 : i32
    return %arg0, %c0_i32 : i32, i32
  }
}

</mosaic_0001>

<llo_original>
// kernel: tpu_custom_call.1
$region0: #{tpu_custom_call.1}
  #allocation0 [shape = 'u32[]', space=smem, size = 0x4, offset = 0x4, fixed_abs, tag = 'smem constant byte address 0x4 - core index']
  #allocation1 [shape = 'u32[144,128]{1,0:T(1,128)}', space=vmem, size = 0x12000, scoped, tag = 'internal scratch']
  %s0 = inlined_call_operand.hbm [shape: f32[16,128], index: 0, kind: input, shape index: {}]
  %s1 = inlined_call_operand.hbm [shape: f32[16,128], index: 1, kind: output, shape index: {}]
  %s2 = sld [smem:[#allocation0]]
  $region41: #{tpu_custom_call.1} parent=0
    _
  %s4 = ssub.s32 1, %s2
  %s5 = scalar_select 0, %s4, %s2
  $region1: #{tpu_custom_call.1} parent=0
    #allocation2 [shape = 'u8[8192]{0}', space=vmem, size = 0x2000, scoped, tag = 'input window, operand 0']
    #allocation3 [shape = 's32[2]{0}', space=sflag, size = 0x8, scoped, tag = 'scoped memory for tpu_custom_call.1']
    #allocation4 [shape = 's32[2]{0}', space=sflag, size = 0x8, scoped, tag = 'scoped memory for tpu_custom_call.1']
    #allocation5 [shape = 'u8[8192]{0}', space=vmem, size = 0x2000, scoped, tag = 'output window, operand 0']
    %6 = vsyncpa [#allocation3], 0
    %s7 = scalar_lea.sflag [#allocation3], 1
    %8 = vsyncpa %s7, 0
    %9 = vsyncpa [#allocation4], 0
    %s10 = scalar_lea.sflag [#allocation4], 1
    %11 = vsyncpa %s10, 0
    loop: start=0, step=1, limit=4
    $region2: #{tpu_custom_call.1} parent=1 // loop_pre_header
      _
    $region3: #{tpu_custom_call.1} parent=1 // loop_header
      %s13 = sphi 0, %s17
      %p14 = scmp.ge.s32.totalorder %s13, 4
      %s23 = sphi 0, %s25
      %s26 = sphi 0, %s23
      %s27 = sphi 0, %s26
      %s43 = sphi 0, %s27
      %s49 = sphi 0, %s51
      %s52 = sphi 0, %s49
      %s53 = sphi 0, %s52
      %s69 = sphi 0, %s53
    $region4: #{tpu_custom_call.1} parent=1 // loop_header_branch
      %16 = sbr.rel (%p14) target = $region8
    $region5: #{tpu_custom_call.1} parent=1 // loop_body
      %s18 = ssub.s32 %s13, 1
      %s19 = ssub.s32 %s13, 2
      %s20 = sadd.s32 %s13, 1
      %s21 = ssub.s32 %s13, %s20
      %p22 = scmp.eq.s32.totalorder %s21, 0
      %s24 = sadd.s32 %s23, 1
      %s25 = scalar_select %p22, %s23, %s24
      %p28 = pneg %p22
      %p29 = scmp.eq.s32.totalorder %s13, 1
      %p30 = por %p28, %p29
      %p31 = scmp.ne.s32.totalorder %s23, %s26
      %p32 = scmp.eq.s32.totalorder %s13, 0
      %p33 = por %p31, %p32
      %p34 = scmp.ne.s32.totalorder %s23, %s26
      %p35 = scmp.eq.s32.totalorder %s18, 1
      %p36 = por %p34, %p35
      %p37 = scmp.ne.s32.totalorder %s26, %s27
      %p38 = scmp.eq.s32.totalorder %s18, 0
      %p39 = por %p37, %p38
      %p40 = scmp.ne.s32.totalorder %s26, %s27
      %p41 = scmp.eq.s32.totalorder %s19, 1
      %p42 = por %p40, %p41
      %p44 = scmp.ne.s32.totalorder %s27, %s43
      %p45 = scmp.eq.s32.totalorder %s19, 0
      %p46 = por %p44, %p45
      %s47 = ssub.s32 %s13, %s20
      %p48 = scmp.eq.s32.totalorder %s47, 0
      %s50 = sadd.s32 %s49, 1
      %s51 = scalar_select %p48, %s49, %s50
      %p54 = pneg %p48
      %p55 = scmp.eq.s32.totalorder %s13, 1
      %p56 = por %p54, %p55
      %p57 = scmp.ne.s32.totalorder %s49, %s52
      %p58 = scmp.eq.s32.totalorder %s13, 0
      %p59 = por %p57, %p58
      %p60 = scmp.ne.s32.totalorder %s49, %s52
      %p61 = scmp.eq.s32.totalorder %s18, 1
      %p62 = por %p60, %p61
      %p63 = scmp.ne.s32.totalorder %s52, %s53
      %p64 = scmp.eq.s32.totalorder %s18, 0
      %p65 = por %p63, %p64
      %p66 = scmp.ne.s32.totalorder %s52, %s53
      %p67 = scmp.eq.s32.totalorder %s19, 1
      %p68 = por %p66, %p67
      %p70 = scmp.ne.s32.totalorder %s53, %s69
      %p71 = scmp.eq.s32.totalorder %s19, 0
      %p72 = por %p70, %p71
      %p73 = scmp.le.s32.totalorder 1, %s13
      %p74 = scmp.lt.s32.totalorder %s13, 3
      %p75 = pnand %p73, %p74
      %p76 = pneg %p75
      // Predicated region
      $region9: #{tpu_custom_call.1} parent=5 // pred_check
        _
      $region10: #{tpu_custom_call.1} parent=5 // pred_check_branch
        %78 = sbr.rel (%p75) target = $region12
      $region11: #{tpu_custom_call.1} parent=5 // pred_region
        %s79 = ssub.s32 %s13, 1
      $region12: #{tpu_custom_call.1} parent=5 // pred_fallthru
        _
      %p80 = scmp.lt.s32.totalorder %s13, 2
      // Predicated region
      $region13: #{tpu_custom_call.1} parent=5 // pred_check
        %p81 = pneg %p80
      $region14: #{tpu_custom_call.1} parent=5 // pred_check_branch
        %83 = sbr.rel (%p81) target = $region16
      $region15: #{tpu_custom_call.1} parent=5 // pred_region
        // Predicated region
        $region17: #{tpu_custom_call.1} parent=15 // pred_check
          %p84 = pneg %p33
        $region18: #{tpu_custom_call.1} parent=15 // pred_check_branch
          %86 = sbr.rel (%p84) target = $region20
        $region19: #{tpu_custom_call.1} parent=15 // pred_region
          %s87 = sand.u32 %s23, 1
          %s88 = scalar_lea.sflag [#allocation3], %s87
          %s89 = sand.u32 %s23, 1
          %s90 = smul.addr %s89, 8
          %s91 = scalar_lea.vmem [#allocation2], %s90
          %s93 = ssub.s32 128, 128
          %94 = vsyncadd %s88, %s93
          %s95 = smul.addr %s13, 128
          %s96 = scalar_lea.hbm %s0, %s95
          %s98 = sshll.u32 %s91, 4
          %s99 = int_to_ptr.vmem [resolvable:$true] %s98
          %101 = dma.hbm_to_vmem [thread:$0]  %s96, 128, %s99, %s88
        $region20: #{tpu_custom_call.1} parent=15 // pred_fallthru
          _
      $region16: #{tpu_custom_call.1} parent=5 // pred_fallthru
        _
      %p102 = scmp.le.s32.totalorder 1, %s13
      %p103 = scmp.lt.s32.totalorder %s13, 3
      %p104 = pnand %p102, %p103
      %p105 = pneg %p104
      // Predicated region
      $region21: #{tpu_custom_call.1} parent=5 // pred_check
        _
      $region22: #{tpu_custom_call.1} parent=5 // pred_check_branch
        %107 = sbr.rel (%p104) target = $region24
      $region23: #{tpu_custom_call.1} parent=5 // pred_region
        %s108 = ssub.s32 %s13, 1
        %s109 = sand.u32 %s26, 1
        %s110 = scalar_lea.sflag [#allocation3], %s109
        %s111 = sand.u32 %s26, 1
        %s112 = smul.addr %s111, 8
        %s113 = scalar_lea.vmem [#allocation2], %s112
        // Predicated region
        $region25: #{tpu_custom_call.1} parent=23 // pred_check
          %p114 = pneg %p39
        $region26: #{tpu_custom_call.1} parent=23 // pred_check_branch
          %116 = sbr.rel (%p114) target = $region28
        $region27: #{tpu_custom_call.1} parent=23 // pred_region
          %117 = dma.done %s110, 128
        $region28: #{tpu_custom_call.1} parent=23 // pred_fallthru
          _
        %s118 = sand.u32 %s26, 1
        %s119 = scalar_lea.sflag [#allocation3], %s118
        %s120 = sand.u32 %s26, 1
        %s121 = smul.addr %s120, 8
        %s122 = scalar_lea.vmem [#allocation2], %s121
        %p123 = pneg %p39
        %p124 = pneg %p36
        %p125 = pneg %p65
        %p126 = pneg %p62
        %s127 = sand.u32 %s52, 1
        %s128 = scalar_lea.sflag [#allocation4], %s127
        %s129 = sand.u32 %s52, 1
        %s130 = smul.addr %s129, 8
        %s131 = scalar_lea.vmem [#allocation5], %s130
        %v132 = vld [vmem:[%s113] sm:$0xff]
        %v133 = vand.u32 2147483647, %v132
        %vm134 = vcmp.le.f32.partialorder %v133, 0.7853982
        %vm135 = vcmp.lt.s32.totalorder %v132, 0
        %v136 = vand.u32 %v132, 2139095040
        %v137 = vshrl.u32 %v136, 23
        %v138 = vsub.s32 %v137, 127
        %v139 = vand.u32 2147483647, %v132
        %v140 = vand.u32 %v139, 8388607
        %v141 = vor.u32 %v140, 8388608
        %v142 = vsub.s32 0, %v141
        %v143 = vadd.s32 %v138, 1
        %vm144 = vcmp.gt.s32.totalorder %v143, 0
        %v145 = vsel %vm144, %v143, 0
        %v146 = vshrl.u32 %v145, 5
        %v147 = vand.u32 %v145, 31
        %v148 = vsub.s32 32, %v147
        %v149 = vshrl.u32 683565275, %v148
        %v150 = vshll.u32 683565275, %v147
        %v151 = vshrl.u32 2475754826, %v148
        %v152 = vor.u32 %v150, %v151
        %v153 = vshll.u32 2475754826, %v147
        %v154 = vshrl.u32 2131351028, %v148
        %v155 = vor.u32 %v153, %v154
        %v156 = vshll.u32 2131351028, %v147
        %v157 = vshrl.u32 2102212464, %v148
        %v158 = vor.u32 %v156, %v157
        %v159 = vshll.u32 2102212464, %v147
        %v160 = vshrl.u32 920167782, %v148
        %v161 = vor.u32 %v159, %v160
        %v162 = vshll.u32 920167782, %v147
        %v163 = vshrl.u32 1326507024, %v148
        %v164 = vor.u32 %v162, %v163
        %vm165 = vcmp.lt.s32.totalorder %v146, 1
        %vm166 = vcmp.lt.s32.totalorder %v146, 2
        %vm167 = vcmp.lt.s32.totalorder %v146, 3
        %vm168 = vcmp.lt.s32.totalorder %v146, 4
        %v169 = vsel %vm165, %v149, %v152
        %v170 = vsel %vm168, %v158, 2102212464
        %v171 = vsel %vm167, %v155, %v170
        %v172 = vsel %vm166, %v169, %v171
        %v173 = vsel %vm165, %v152, %v155
        %v174 = vsel %vm168, %v161, 920167782
        %v175 = vsel %vm167, %v158, %v174
        %v176 = vsel %vm166, %v173, %v175
        %v177 = vsel %vm165, %v155, %v158
        %v178 = vsel %vm168, %v164, 1326507024
        %v179 = vsel %vm167, %v161, %v178
        %v180 = vsel %vm166, %v177, %v179
        %v181 = vshll.u32 %v141, 8
        %v182 = vmul.u32.u64.compose %v181, %v180
        %v183 = vextract.low.u32 %v182
        %v184 = vextract.high.u32 %v182
        %v185 = vmul.u32.u64.compose %v181, %v176
        %v186 = vextract.low.u32 %v185
        %v187 = vextract.high.u32 %v185
        %v188 = vmul.u32 %v181, %v172
        %v189 = vadd.s32 %v184, %v186
        %vm190 = vc.u32 %v184, %v186
        %v191 = vadd.s32 %v187, 1
        %v192 = vsel %vm190, %v191, %v187
        %v193 = vadd.s32 %v188, %v192
        %v194 = vadd.s32 %v193, 536870912
        %v195 = vshrl.u32 %v194, 30
        %v196 = vshll.u32 %v195, 30
        %v197 = vsub.s32 %v193, %v196
        %vm198 = vcmp.lt.s32.totalorder %v197, 0
        %v199 = vsub.s32 0, %v197
        %v200 = vsel %vm198, %v199, %v197
        %v201 = vclz %v200
        %v202 = vsub.s32 %v201, 2
        %vm203 = vcmp.gt.s32.totalorder 0, %v202
        %v204 = vsel %vm203, 0, %v202
        %v205 = vsub.s32 32, %v204
        %v206 = vshll.u32 %v197, %v204
        %v207 = vshrl.u32 %v189, %v205
        %v208 = vor.u32 %v206, %v207
        %v209 = vsub.s32 4294967266, %v204
        %v210 = vadd.s32 %v209, 127
        %v211 = vshll.u32 %v210, 23
        %v212 = vor.u32 4788187, %v211
        %v213 = vand.u32 2147483647, %v212
        %v215 = vcvt.s32.f32 %v208
        %v216 = vmul.f32 %v215, %v213
        %v217 = vxor.u32 %v216, 2147483648
        %v218 = vsel %vm135, %v217, %v216
        %v219 = vsub.s32 4, %v195
        %v220 = vsel %vm135, %v219, %v195
        %v221 = vsel %vm134, %v132, %v218
        %v222 = vsel %vm134, 0, %v220
        %v223 = vcosq.f32.pop %v221
        %v224 = vsinq.f32.pop %v221
        %vm225 = vweird.f32 %v132
        %v226 = vand.u32 %v222, 3
        %vm227 = vcmp.lt.s32.totalorder %v226, 2
        %vm228 = vcmp.eq.s32.totalorder %v226, 0
        %v229 = vxor.u32 %v224, 2147483648
        %v230 = vsel %vm228, %v223, %v229
        %vm231 = vcmp.eq.s32.totalorder %v226, 2
        %v232 = vxor.u32 %v223, 2147483648
        %v233 = vsel %vm231, %v232, %v224
        %v234 = vsel %vm227, %v230, %v233
        %v235 = vsel %vm225, nan, %v234
        %v236 = vand.u32 2147483647, %v235
        %vm237 = vcmp.le.f32.partialorder %v236, 0.7853982
        %vm238 = vcmp.lt.s32.totalorder %v235, 0
        %v239 = vand.u32 %v235, 2139095040
        %v240 = vshrl.u32 %v239, 23
        %v241 = vsub.s32 %v240, 127
        %v242 = vand.u32 2147483647, %v235
        %v243 = vand.u32 %v242, 8388607
        %v244 = vor.u32 %v243, 8388608
        %v245 = vsub.s32 0, %v244
        %v246 = vadd.s32 %v241, 1
        %vm247 = vcmp.gt.s32.totalorder %v246, 0
        %v248 = vsel %vm247, %v246, 0
        %v249 = vshrl.u32 %v248, 5
        %v250 = vand.u32 %v248, 31
        %v251 = vsub.s32 32, %v250
        %v252 = vshrl.u32 683565275, %v251
        %v253 = vshll.u32 683565275, %v250
        %v254 = vshrl.u32 2475754826, %v251
        %v255 = vor.u32 %v253, %v254
        %v256 = vshll.u32 2475754826, %v250
        %v257 = vshrl.u32 2131351028, %v251
        %v258 = vor.u32 %v256, %v257
        %v259 = vshll.u32 2131351028, %v250
        %v260 = vshrl.u32 2102212464, %v251
        %v261 = vor.u32 %v259, %v260
        %v262 = vshll.u32 2102212464, %v250
        %v263 = vshrl.u32 920167782, %v251
        %v264 = vor.u32 %v262, %v263
        %v265 = vshll.u32 920167782, %v250
        %v266 = vshrl.u32 1326507024, %v251
        %v267 = vor.u32 %v265, %v266
        %vm268 = vcmp.lt.s32.totalorder %v249, 1
        %vm269 = vcmp.lt.s32.totalorder %v249, 2
        %vm270 = vcmp.lt.s32.totalorder %v249, 3
        %vm271 = vcmp.lt.s32.totalorder %v249, 4
        %v272 = vsel %vm268, %v252, %v255
        %v273 = vsel %vm271, %v261, 2102212464
        %v274 = vsel %vm270, %v258, %v273
        %v275 = vsel %vm269, %v272, %v274
        %v276 = vsel %vm268, %v255, %v258
        %v277 = vsel %vm271, %v264, 920167782
        %v278 = vsel %vm270, %v261, %v277
        %v279 = vsel %vm269, %v276, %v278
        %v280 = vsel %vm268, %v258, %v261
        %v281 = vsel %vm271, %v267, 1326507024
        %v282 = vsel %vm270, %v264, %v281
        %v283 = vsel %vm269, %v280, %v282
        %v284 = vshll.u32 %v244, 8
        %v285 = vmul.u32.u64.compose %v284, %v283
        %v286 = vextract.low.u32 %v285
        %v287 = vextract.high.u32 %v285
        %v288 = vmul.u32.u64.compose %v284, %v279
        %v289 = vextract.low.u32 %v288
        %v290 = vextract.high.u32 %v288
        %v291 = vmul.u32 %v284, %v275
        %v292 = vadd.s32 %v287, %v289
        %vm293 = vc.u32 %v287, %v289
        %v294 = vadd.s32 %v290, 1
        %v295 = vsel %vm293, %v294, %v290
        %v296 = vadd.s32 %v291, %v295
        %v297 = vadd.s32 %v296, 536870912
        %v298 = vshrl.u32 %v297, 30
        %v299 = vshll.u32 %v298, 30
        %v300 = vsub.s32 %v296, %v299
        %vm301 = vcmp.lt.s32.totalorder %v300, 0
        %v302 = vsub.s32 0, %v300
        %v303 = vsel %vm301, %v302, %v300
        %v304 = vclz %v303
        %v305 = vsub.s32 %v304, 2
        %vm306 = vcmp.gt.s32.totalorder 0, %v305
        %v307 = vsel %vm306, 0, %v305
        %v308 = vsub.s32 32, %v307
        %v309 = vshll.u32 %v300, %v307
        %v310 = vshrl.u32 %v292, %v308
        %v311 = vor.u32 %v309, %v310
        %v312 = vsub.s32 4294967266, %v307
        %v313 = vadd.s32 %v312, 127
        %v314 = vshll.u32 %v313, 23
        %v315 = vor.u32 4788187, %v314
        %v316 = vand.u32 2147483647, %v315
        %v318 = vcvt.s32.f32 %v311
        %v319 = vmul.f32 %v318, %v316
        %v320 = vxor.u32 %v319, 2147483648
        %v321 = vsel %vm238, %v320, %v319
        %v322 = vsub.s32 4, %v298
        %v323 = vsel %vm238, %v322, %v298
        %v324 = vsel %vm237, %v235, %v321
        %v325 = vsel %vm237, 0, %v323
        %v326 = vcosq.f32.pop %v324
        %v327 = vsinq.f32.pop %v324
        %vm328 = vweird.f32 %v235
        %v329 = vadd.s32 %v325, 3
        %v330 = vand.u32 %v329, 3
        %vm331 = vcmp.lt.s32.totalorder %v330, 2
        %vm332 = vcmp.eq.s32.totalorder %v330, 0
        %v333 = vxor.u32 %v327, 2147483648
        %v334 = vsel %vm332, %v326, %v333
        %vm335 = vcmp.eq.s32.totalorder %v330, 2
        %v336 = vxor.u32 %v326, 2147483648
        %v337 = vsel %vm335, %v336, %v327
        %v338 = vsel %vm331, %v334, %v337
        %v339 = vsel %vm328, nan, %v338
        %340 = vst [vmem:[%s131] sm:$0xff] %v339
        %s341 = sand.u32 %s52, 1
        %s342 = scalar_lea.sflag [#allocation4], %s341
        %s343 = sand.u32 %s52, 1
        %s344 = smul.addr %s343, 8
        %s345 = scalar_lea.vmem [#allocation5], %s344
        // Predicated region
        $region29: #{tpu_custom_call.1} parent=23 // pred_check
          %p346 = pneg %p62
        $region30: #{tpu_custom_call.1} parent=23 // pred_check_branch
          %348 = sbr.rel (%p346) target = $region32
        $region31: #{tpu_custom_call.1} parent=23 // pred_region
          %s350 = ssub.s32 128, 128
          %351 = vsyncadd %s342, %s350
          %s352 = smul.addr %s18, 128
          %s353 = scalar_lea.hbm %s1, %s352
          %s355 = sshll.u32 %s345, 4
          %s356 = int_to_ptr.vmem [resolvable:$true] %s355
          %358 = dma.vmem_to_hbm [thread:$0]  %s356, 128, %s353, %s342
        $region32: #{tpu_custom_call.1} parent=23 // pred_fallthru
          _
      $region24: #{tpu_custom_call.1} parent=5 // pred_fallthru
        _
      %p359 = scmp.le.s32.totalorder 2, %s13
      // Predicated region
      $region33: #{tpu_custom_call.1} parent=5 // pred_check
        %p360 = pneg %p359
      $region34: #{tpu_custom_call.1} parent=5 // pred_check_branch
        %362 = sbr.rel (%p360) target = $region36
      $region35: #{tpu_custom_call.1} parent=5 // pred_region
        %s363 = ssub.s32 %s13, 2
        // Predicated region
        $region37: #{tpu_custom_call.1} parent=35 // pred_check
          %p364 = pneg %p68
        $region38: #{tpu_custom_call.1} parent=35 // pred_check_branch
          %366 = sbr.rel (%p364) target = $region40
        $region39: #{tpu_custom_call.1} parent=35 // pred_region
          %s367 = sand.u32 %s53, 1
          %s368 = scalar_lea.sflag [#allocation4], %s367
          %s369 = sand.u32 %s53, 1
          %s370 = smul.addr %s369, 8
          %s371 = scalar_lea.vmem [#allocation5], %s370
          %372 = dma.done %s368, 128
        $region40: #{tpu_custom_call.1} parent=35 // pred_fallthru
          _
      $region36: #{tpu_custom_call.1} parent=5 // pred_fallthru
        _
    $region6: #{tpu_custom_call.1} parent=1 // loop_footer
      %s17 = sadd.s32 1, %s13
    $region7: #{tpu_custom_call.1} parent=1 // loop_footer_branch
      %12 = sbr.rel target = $region3
    $region8: #{tpu_custom_call.1} parent=1 // loop_exit
      _
    %373 = vsyncpa [#allocation3], 1
    %s374 = scalar_lea.sflag [#allocation3], 1
    %375 = vsyncpa %s374, 1
    %376 = vsyncpa [#allocation4], 1
    %s377 = scalar_lea.sflag [#allocation4], 1
    %378 = vsyncpa %s377, 1

</llo_original>
